<compile_context>
chip_gen: v6e
topology: v6e:2x2x1
jax: 0.10.0
libtpu: 0.0.40
codegen_flags: <defaults>
</compile_context>

<pallas_src>
import functools

import jax
import jax.numpy as jnp
from jax.experimental import pallas as pl
from jax.experimental.pallas import tpu as pltpu


def _round_up(x, m):
    return ((x + m - 1) // m) * m


# -----------------------------------------------------------------------------
# Kernel 1: K-tiled matmul producing per-split partial logits.
# -----------------------------------------------------------------------------
def _tta_matmul_kernel(feat_ref, w_ref, part_ref):
    """Grid (nsplit, n_k): axis 0 'parallel' (splits K across TensorCores on v7x),
    axis 1 is the serial K reduction for that split.

    feat_ref : (B, tk)     compute-dtype feature tile (flattened, zero-padded image cols)
    w_ref    : (tk, T*NC)  compute-dtype [W_identity | W_hflip] columns (unpadded classes)
    part_ref : (B, T*NC)   f32 partial logits for this split (resident across k)
    """
    k = pl.program_id(1)

    @pl.when(k == 0)
    def _init():
        part_ref[...] = jnp.zeros_like(part_ref)

    part_ref[...] += jnp.dot(
        feat_ref[...], w_ref[...], preferred_element_type=jnp.float32
    )


# -----------------------------------------------------------------------------
# Kernel 2: tiny one-shot epilogue (combine splits + bias + both softmaxes).
# -----------------------------------------------------------------------------
def _tta_epilogue_kernel(part_ref, b_ref, final_ref, all_ref, *, n_t, nc):
    """part_ref: (nsplit, B, T*NC) f32 ; b_ref: (1, T*NC) f32
    final_ref : (B, NC)   softmax(mean_t logits_t)
    all_ref   : (B, T*NC) per-transform softmax, row-major (B, T, NC) flat
    """
    logits = jnp.sum(part_ref[...], axis=0) + b_ref[...]          # (B, T*NC)

    mean_acc = jnp.zeros(final_ref.shape, jnp.float32)
    for t in range(n_t):                                           # static unroll (T = 2)
        lt = logits[:, t * nc:(t + 1) * nc]                        # (B, NC)
        m = jnp.max(lt, axis=-1, keepdims=True)
        e = jnp.exp(lt - m)
        all_ref[:, t * nc:(t + 1) * nc] = e / jnp.sum(e, axis=-1, keepdims=True)
        mean_acc = mean_acc + lt

    avg = mean_acc * (1.0 / n_t)                                   # Merger 'mean': output / n
    m2 = jnp.max(avg, axis=-1, keepdims=True)
    e2 = jnp.exp(avg - m2)
    final_ref[...] = e2 / jnp.sum(e2, axis=-1, keepdims=True)


# -----------------------------------------------------------------------------
# Jittable forward (weights/bias are passed in already folded / padded / cast).
# -----------------------------------------------------------------------------
def _tta_forward(image, w_cat, b_cat, *, D, D_pad, tk, n_k, nsplit, n_t, nc,
                 compute_dtype, vmem_cap):
    B = image.shape[0]
    tnc = n_t * nc

    feat = image.reshape(B, D).astype(compute_dtype)
    if D_pad != D:
        feat = jnp.pad(feat, ((0, 0), (0, D_pad - D)))

    # VMEM budget (double-buffered weight tile dominates; lane dim padded to 128 internally).
    itemsize = jnp.dtype(compute_dtype).itemsize
    b_pad = _round_up(B, 8 * (4 // itemsize))
    est = 2 * tk * _round_up(tnc, 128) * itemsize + 2 * b_pad * tk * itemsize + (2 << 20)
    vmem_limit = int(min(vmem_cap // 2, max(16 * 1024 * 1024, 2 * est)))

    partial_logits = pl.pallas_call(
        _tta_matmul_kernel,
        out_shape=jax.ShapeDtypeStruct((nsplit, B, tnc), jnp.float32),
        grid_spec=pltpu.PrefetchScalarGridSpec(
            num_scalar_prefetch=0,
            grid=(nsplit, n_k),
            in_specs=[
                pl.BlockSpec((B, tk), lambda s, k: (0, s * n_k + k)),
                pl.BlockSpec((tk, tnc), lambda s, k: (s * n_k + k, 0)),
            ],
            out_specs=pl.BlockSpec((None, B, tnc), lambda s, k: (s, 0, 0)),
        ),
        compiler_params=pltpu.CompilerParams(
            dimension_semantics=("parallel", "arbitrary"),
            vmem_limit_bytes=vmem_limit,
        ),
    )(feat, w_cat)

    final_probs, all_flat = pl.pallas_call(
        functools.partial(_tta_epilogue_kernel, n_t=n_t, nc=nc),
        out_shape=(
            jax.ShapeDtypeStruct((B, nc), jnp.float32),
            jax.ShapeDtypeStruct((B, tnc), jnp.float32),
        ),
    )(partial_logits, b_cat)

    # Flat (B, T*NC) is already row-major (B, T, NC): free reshape in the wrapper.
    return final_probs, all_flat.reshape(B, n_t, nc)


# -----------------------------------------------------------------------------
# Wrapper that caches the folded / padded / cast weights across forward calls.
# -----------------------------------------------------------------------------
class TTAClassifier:
    N_TRANSFORMS = 2  # Identity, HorizontalFlip

    def __init__(self, image_shape, weight, bias, *, nsplit=2, tk_max=8192,
                 compute_dtype=jnp.bfloat16):
        C, H, W = image_shape
        D = C * H * W
        assert weight.shape[0] == D, "weight must be (C*H*W, num_classes)"
        NC = weight.shape[1]
        T = self.N_TRANSFORMS
        self.image_shape = (C, H, W)
        self.num_classes = NC

        # Fold HorizontalFlip into the weight matrix (row permutation of the W axis
        # of the C,H,W flatten) -> a single matmul handles both transforms.
        w_flip = weight.reshape(C, H, W, NC)[:, :, ::-1, :].reshape(D, NC)
        w_cat = jnp.concatenate([weight, w_flip], axis=1)            # (D, T*NC), no class pad

        # Tile size from a VMEM budget (<= ~4 MiB per weight buffer) and D padding so every
        # tile is full regardless of D's divisors (robust for e.g. 3*299*299).
        itemsize = jnp.dtype(compute_dtype).itemsize
        tnc_lanes = _round_up(T * NC, 128)
        tk_budget = max(512, ((4 << 20) // (tnc_lanes * itemsize)) // 512 * 512)
        tk = min(tk_max, tk_budget, _round_up(pl.cdiv(D, nsplit), 512))
        n_k = pl.cdiv(D, nsplit * tk)
        D_pad = nsplit * n_k * tk

        # Cached ONCE (perf fix #1): fold / pad / cast never happen in the forward path.
        self.w_cat = jnp.pad(w_cat, ((0, D_pad - D), (0, 0))).astype(compute_dtype)
        self.b_cat = jnp.tile(bias.astype(jnp.float32), (T,)).reshape(1, T * NC)

        try:
            vmem_cap = int(pltpu.get_tpu_info().vmem_capacity_bytes)
        except Exception:
            vmem_cap = 64 * 1024 * 1024   # conservative (v7x per-TC VMEM)

        self._fwd = jax.jit(functools.partial(
            _tta_forward, D=D, D_pad=D_pad, tk=tk, n_k=n_k, nsplit=nsplit,
            n_t=T, nc=NC, compute_dtype=compute_dtype, vmem_cap=vmem_cap))

    def __call__(self, image):
        assert image.shape[1:] == self.image_shape
        return self._fwd(image, self.w_cat, self.b_cat)


# -----------------------------------------------------------------------------
# Pure-JAX f32 reference of the same forward (matches the PyTorch module).
# -----------------------------------------------------------------------------
def _reference(image, weight, bias):
    B = image.shape[0]
    aug_imgs = [image, image[:, :, :, ::-1]]
    logits = [a.reshape(B, -1) @ weight + bias for a in aug_imgs]
    all_probs = jnp.stack([jax.nn.softmax(l, axis=-1) for l in logits], axis=1)
    mean_logits = sum(logits) / len(logits)
    return jax.nn.softmax(mean_logits, axis=-1), all_probs


if __name__ == "__main__":
    key = jax.random.PRNGKey(0)
    k_x, k_w, k_b = jax.random.split(key, 3)

    B, C, H, W = 2, 4, 16, 16
    NC = 8
    D = C * H * W

    image = jax.random.normal(k_x, (B, C, H, W), dtype=jnp.float32)
    weight = jax.random.normal(k_w, (D, NC), dtype=jnp.float32) * 0.05
    bias = jax.random.normal(k_b, (NC,), dtype=jnp.float32) * 0.1

    model = TTAClassifier((C, H, W), weight, bias)          # weights folded/cached once
    final_probs, all_probs = model(image)
    jax.block_until_ready((final_probs, all_probs))
    final_probs, all_probs = model(image)                   # 2nd call reuses cached weights
    jax.block_until_ready((final_probs, all_probs))

    ref_final, ref_all = _reference(image, weight, bias)
    assert final_probs.shape == (B, NC)
    assert all_probs.shape == (B, 2, NC)
    # bf16 features/weights (intentional, configurable) => bf16-appropriate tolerance.
    assert jnp.allclose(final_probs, ref_final, atol=2e-2, rtol=0)
    assert jnp.allclose(all_probs, ref_all, atol=2e-2, rtol=0)
    # Exact softmax division in the epilogue => probabilities sum to 1 tightly.
    assert jnp.allclose(jnp.sum(final_probs, axis=-1), 1.0, atol=1e-5)
    assert jnp.allclose(jnp.sum(all_probs, axis=-1), 1.0, atol=1e-5)

    print("KERNEL_OK")
</pallas_src>

<mosaic_0001>
module attributes {stable_mosaic.version = 11 : i64} {
  func.func @_tta_matmul_kernel(%arg0: i32, %arg1: i32, %arg2: memref<2x512xbf16, #tpu.memory_space<vmem>>, %arg3: memref<512x16xbf16, #tpu.memory_space<vmem>>, %arg4: memref<1x2x16xf32, #tpu.memory_space<vmem>>) attributes {dimension_semantics = [#tpu.dimension_semantics<parallel>, #tpu.dimension_semantics<arbitrary>], iteration_bounds = array<i64: 2, 1>, scalar_prefetch = 0 : i64, scratch_operands = 0 : i64, tpu.core_type = #tpu.core_type<tc>, window_params = [{transform_indices = @transform_0, window_bounds = array<i64: 2, 512>}, {transform_indices = @transform_1, window_bounds = array<i64: 512, 16>}, {transform_indices = @transform_2, window_bounds = array<i64: 1, 2, 16>}]} {
    %c0_i32 = arith.constant 0 : i32
    %0 = arith.cmpi eq, %arg1, %c0_i32 : i32
    %1 = arith.extui %0 : i1 to i32
    %c0_i32_0 = arith.constant 0 : i32
    %2 = arith.cmpi ne, %1, %c0_i32_0 : i32
    scf.if %2 {
      %cst_10 = arith.constant 0.000000e+00 : f32
      %12 = vector.broadcast %cst_10 : f32 to vector<2x16xf32>
      %c0_11 = arith.constant 0 : index
      %c0_12 = arith.constant 0 : index
      %c0_13 = arith.constant 0 : index
      %13 = vector.load %arg4[%c0_11, %c0_12, %c0_13] : memref<1x2x16xf32, #tpu.memory_space<vmem>>, vector<1x2x16xf32>
      %14 = vector.shape_cast %13 : vector<1x2x16xf32> to vector<2x16xf32>
      %15 = vector.shape_cast %12 : vector<2x16xf32> to vector<1x2x16xf32>
      tpu.vector_store %arg4[%c0_11, %c0_12, %c0_13], %15 {strides = array<i32>} : memref<1x2x16xf32, #tpu.memory_space<vmem>>, vector<1x2x16xf32>,
    } else {
    }
    %c0 = arith.constant 0 : index
    %c0_1 = arith.constant 0 : index
    %c0_2 = arith.constant 0 : index
    %3 = vector.load %arg4[%c0, %c0_1, %c0_2] : memref<1x2x16xf32, #tpu.memory_space<vmem>>, vector<1x2x16xf32>
    %4 = vector.shape_cast %3 : vector<1x2x16xf32> to vector<2x16xf32>
    %c0_3 = arith.constant 0 : index
    %c0_4 = arith.constant 0 : index
    %5 = vector.load %arg2[%c0_3, %c0_4] : memref<2x512xbf16, #tpu.memory_space<vmem>>, vector<2x512xbf16>
    %c0_5 = arith.constant 0 : index
    %c0_6 = arith.constant 0 : index
    %6 = vector.load %arg3[%c0_5, %c0_6] : memref<512x16xbf16, #tpu.memory_space<vmem>>, vector<512x16xbf16>
    %cst = arith.constant dense<0.000000e+00> : vector<2x16xf32>
    %7 = tpu.matmul %5, %6, %cst {dimension_numbers = #tpu.dot_dimension_numbers<[1], [0], [0], [1], [0, 0, 1, 1], [], []>} : vector<2x512xbf16>, vector<512x16xbf16>, vector<2x16xf32> -> vector<2x16xf32>
    %8 = arith.addf %4, %7 : vector<2x16xf32>
    %c0_7 = arith.constant 0 : index
    %c0_8 = arith.constant 0 : index
    %c0_9 = arith.constant 0 : index
    %9 = vector.load %arg4[%c0_7, %c0_8, %c0_9] : memref<1x2x16xf32, #tpu.memory_space<vmem>>, vector<1x2x16xf32>
    %10 = vector.shape_cast %9 : vector<1x2x16xf32> to vector<2x16xf32>
    %11 = vector.shape_cast %8 : vector<2x16xf32> to vector<1x2x16xf32>
    tpu.vector_store %arg4[%c0_7, %c0_8, %c0_9], %11 {strides = array<i32>} : memref<1x2x16xf32, #tpu.memory_space<vmem>>, vector<1x2x16xf32>,
    return
  }
  func.func @transform_0(%arg0: i32, %arg1: i32) -> (i32, i32) {
    %c1_i32 = arith.constant 1 : i32
    %0 = arith.muli %arg0, %c1_i32 : i32
    %1 = arith.addi %0, %arg1 : i32
    %c0_i32 = arith.constant 0 : i32
    %c0_i32_0 = arith.constant 0 : i32
    return %c0_i32, %1 : i32, i32
  }
  func.func @transform_1(%arg0: i32, %arg1: i32) -> (i32, i32) {
    %c1_i32 = arith.constant 1 : i32
    %0 = arith.muli %arg0, %c1_i32 : i32
    %1 = arith.addi %0, %arg1 : i32
    %c0_i32 = arith.constant 0 : i32
    %c0_i32_0 = arith.constant 0 : i32
    return %1, %c0_i32 : i32, i32
  }
  func.func @transform_2(%arg0: i32, %arg1: i32) -> (i32, i32, i32) {
    %c0_i32 = arith.constant 0 : i32
    %c0_i32_0 = arith.constant 0 : i32
    %c0_i32_1 = arith.constant 0 : i32
    return %arg0, %c0_i32, %c0_i32_0 : i32, i32, i32
  }
}

module attributes {stable_mosaic.version = 11 : i64} {
  func.func @_tta_epilogue_kernel(%arg0: memref<2x2x16xf32, #tpu.memory_space<vmem>>, %arg1: memref<1x16xf32, #tpu.memory_space<vmem>>, %arg2: memref<2x8xf32, #tpu.memory_space<vmem>>, %arg3: memref<2x16xf32, #tpu.memory_space<vmem>>) attributes {dimension_semantics = [], scalar_prefetch = 0 : i64, scratch_operands = 0 : i64, tpu.core_type = #tpu.core_type<tc>} {
    %c0 = arith.constant 0 : index
    %c0_0 = arith.constant 0 : index
    %c0_1 = arith.constant 0 : index
    %0 = vector.load %arg0[%c0, %c0_0, %c0_1] : memref<2x2x16xf32, #tpu.memory_space<vmem>>, vector<2x2x16xf32>
    %cst = arith.constant dense<0.000000e+00> : vector<2x16xf32>
    %1 = vector.multi_reduction <add>, %0, %cst [0] : vector<2x2x16xf32> to vector<2x16xf32>
    %c0_2 = arith.constant 0 : index
    %c0_3 = arith.constant 0 : index
    %2 = vector.load %arg1[%c0_2, %c0_3] : memref<1x16xf32, #tpu.memory_space<vmem>>, vector<1x16xf32>
    %3 = vector.broadcast %2 : vector<1x16xf32> to vector<2x16xf32>
    %4 = arith.addf %1, %3 : vector<2x16xf32>
    %cst_4 = arith.constant 0.000000e+00 : f32
    %5 = vector.broadcast %cst_4 : f32 to vector<2x8xf32>
    %6 = vector.extract_strided_slice %4 {offsets = [0, 0], sizes = [2, 8], strides = [1, 1]} : vector<2x16xf32> to vector<2x8xf32>
    %cst_5 = arith.constant dense<0xFF800000> : vector<2xf32>
    %7 = vector.multi_reduction <maximumf>, %6, %cst_5 [1] : vector<2x8xf32> to vector<2xf32>
    %8 = vector.shape_cast %7 : vector<2xf32> to vector<2x1xf32>
    %9 = vector.broadcast %8 : vector<2x1xf32> to vector<2x8xf32>
    %10 = arith.subf %6, %9 : vector<2x8xf32>
    %11 = math.exp %10 : vector<2x8xf32>
    %cst_6 = arith.constant dense<0.000000e+00> : vector<2xf32>
    %12 = vector.multi_reduction <add>, %11, %cst_6 [1] : vector<2x8xf32> to vector<2xf32>
    %13 = vector.shape_cast %12 : vector<2xf32> to vector<2x1xf32>
    %14 = vector.broadcast %13 : vector<2x1xf32> to vector<2x8xf32>
    %15 = arith.divf %11, %14 : vector<2x8xf32>
    %c0_7 = arith.constant 0 : index
    %c0_8 = arith.constant 0 : index
    %16 = vector.load %arg3[%c0_7, %c0_8] : memref<2x16xf32, #tpu.memory_space<vmem>>, vector<2x8xf32>
    tpu.vector_store %arg3[%c0_7, %c0_8], %15 {strides = array<i32>} : memref<2x16xf32, #tpu.memory_space<vmem>>, vector<2x8xf32>,
    %17 = arith.addf %5, %6 : vector<2x8xf32>
    %18 = vector.extract_strided_slice %4 {offsets = [0, 8], sizes = [2, 8], strides = [1, 1]} : vector<2x16xf32> to vector<2x8xf32>
    %cst_9 = arith.constant dense<0xFF800000> : vector<2xf32>
    %19 = vector.multi_reduction <maximumf>, %18, %cst_9 [1] : vector<2x8xf32> to vector<2xf32>
    %20 = vector.shape_cast %19 : vector<2xf32> to vector<2x1xf32>
    %21 = vector.broadcast %20 : vector<2x1xf32> to vector<2x8xf32>
    %22 = arith.subf %18, %21 : vector<2x8xf32>
    %23 = math.exp %22 : vector<2x8xf32>
    %cst_10 = arith.constant dense<0.000000e+00> : vector<2xf32>
    %24 = vector.multi_reduction <add>, %23, %cst_10 [1] : vector<2x8xf32> to vector<2xf32>
    %25 = vector.shape_cast %24 : vector<2xf32> to vector<2x1xf32>
    %26 = vector.broadcast %25 : vector<2x1xf32> to vector<2x8xf32>
    %27 = arith.divf %23, %26 : vector<2x8xf32>
    %c0_11 = arith.constant 0 : index
    %c8 = arith.constant 8 : index
    %28 = vector.load %arg3[%c0_11, %c8] : memref<2x16xf32, #tpu.memory_space<vmem>>, vector<2x8xf32>
    tpu.vector_store %arg3[%c0_11, %c8], %27 {strides = array<i32>} : memref<2x16xf32, #tpu.memory_space<vmem>>, vector<2x8xf32>,
    %29 = arith.addf %17, %18 : vector<2x8xf32>
    %cst_12 = arith.constant 5.000000e-01 : f32
    %30 = vector.broadcast %cst_12 : f32 to vector<2x8xf32>
    %31 = arith.mulf %29, %30 : vector<2x8xf32>
    %cst_13 = arith.constant dense<0xFF800000> : vector<2xf32>
    %32 = vector.multi_reduction <maximumf>, %31, %cst_13 [1] : vector<2x8xf32> to vector<2xf32>
    %33 = vector.shape_cast %32 : vector<2xf32> to vector<2x1xf32>
    %34 = vector.broadcast %33 : vector<2x1xf32> to vector<2x8xf32>
    %35 = arith.subf %31, %34 : vector<2x8xf32>
    %36 = math.exp %35 : vector<2x8xf32>
    %cst_14 = arith.constant dense<0.000000e+00> : vector<2xf32>
    %37 = vector.multi_reduction <add>, %36, %cst_14 [1] : vector<2x8xf32> to vector<2xf32>
    %38 = vector.shape_cast %37 : vector<2xf32> to vector<2x1xf32>
    %39 = vector.broadcast %38 : vector<2x1xf32> to vector<2x8xf32>
    %40 = arith.divf %36, %39 : vector<2x8xf32>
    %c0_15 = arith.constant 0 : index
    %c0_16 = arith.constant 0 : index
    %41 = vector.load %arg2[%c0_15, %c0_16] : memref<2x8xf32, #tpu.memory_space<vmem>>, vector<2x8xf32>
    tpu.vector_store %arg2[%c0_15, %c0_16], %40 {strides = array<i32>} : memref<2x8xf32, #tpu.memory_space<vmem>>, vector<2x8xf32>,
    return
  }
}

</mosaic_0001>

<llo_original>
// kernel: _tta_forward.3
$region0: #{_tta_forward.3}
  #allocation0 [shape = 'u32[]', space=smem, size = 0x4, offset = 0x4, fixed_abs, tag = 'smem constant byte address 0x4 - core index']
  #allocation1 [shape = 'u32[144,128]{1,0:T(1,128)}', space=vmem, size = 0x12000, scoped, tag = 'internal scratch']
  %s0 = inlined_call_operand.vmem [shape: f32[2,2,16], index: 0, kind: input, shape index: {}]
  %s1 = inlined_call_operand.vmem [shape: f32[1,16], index: 1, kind: input, shape index: {}]
  %s2 = inlined_call_operand.hbm [shape: f32[2,8], index: 2, kind: output, shape index: {0}]
  %s3 = inlined_call_operand.vmem [shape: f32[2,16], index: 3, kind: output, shape index: {1}]
  %4 = xla_tuple %s2, %s3
  %s5 = sld [smem:[#allocation0]]
  $region26: #{_tta_forward.3} parent=0
    _
  %s7 = ssub.s32 1, %s5
  %s8 = scalar_select 0, %s7, %s5
  $region1: #{_tta_forward.3} parent=0
    #allocation2 [shape = 'u8[1024]{0}', space=vmem, size = 0x400, scoped, tag = 'output window, operand 0, single buffered']
    #allocation3 [shape = 's32[1]{0}', space=sflag, size = 0x4, scoped, tag = 'scoped memory for _tta_forward.3']
    %9 = vsyncpa [#allocation3], 0
    // Predicated region
    $region2: #{_tta_forward.3} parent=1 // pred_check
      _
    $region3: #{_tta_forward.3} parent=1 // pred_check_branch
      %11 = sbr.rel (0) target = $region5
    $region4: #{_tta_forward.3} parent=1 // pred_region
      _
    $region5: #{_tta_forward.3} parent=1 // pred_fallthru
      _
    // Predicated region
    $region6: #{_tta_forward.3} parent=1 // pred_check
      _
    $region7: #{_tta_forward.3} parent=1 // pred_check_branch
      %13 = sbr.rel (0) target = $region9
    $region8: #{_tta_forward.3} parent=1 // pred_region
      _
    $region9: #{_tta_forward.3} parent=1 // pred_fallthru
      _
    %v14 = vld [vmem:[%s0] sm:$0x3]
    %v15 = vld [vmem:[%s0 + $0x2] sm:$0x3]
    %vm16 = vcmask 123904
    %v17 = vsel %vm16, %v14, 0.0
    %v18 = vsel %vm16, %v15, 0.0
    %v19 = vadd.f32 %v17, %v18
    %v20 = vld [vmem:[%s1] sm:$0x1]
    %v22 = vlaneseq
    %v23 = vshrl.u32 %v22, 7
    %v24 = vsub.s32 0, %v23
    %v25 = vrot.slane %v20, %v24
    %v27 = vadd.f32 %v19, %v25
    %vm28 = vcmask 58368
    %v29 = vsel %vm28, %v27, -inf
    %30 = vmax.xlane.f32.xlu0 %v29
    %v31 = vpop.xlane.xlu0 %30
    %v32 = vsub.f32 %v27, %v31
    %v33 = vmul.f32 %v32, 1.442695
    %v34 = vpow.pop %v33
    %v35 = vsel %vm28, %v34, 0.0
    %36 = vadd.xlane.f32.xlu0 %v35
    %v37 = vpop.xlane.xlu0 %36
    %v38 = vrcp.pop %v37
    %v39 = vmul.f32 %v34, %v38
    %40 = vst.msk [vmem:[%s3] sm:$0x3] %vm28, %v39
    %v41 = vadd.f32 %v27, 0.0
    %vm42 = vcmask 123968
    %v43 = vsel %vm42, %v27, -inf
    %44 = vmax.xlane.f32.xlu0 %v43
    %v45 = vpop.xlane.xlu0 %44
    %v46 = vsub.f32 %v27, %v45
    %v47 = vmul.f32 %v46, 1.442695
    %v48 = vpow.pop %v47
    %50 = vrot.lane.b32.xlu0 %v48, 120
    %v51 = vpop.permute.xlu0 %50
    %v53 = vsel %vm28, %v51, 0.0
    %54 = vadd.xlane.f32.xlu0 %v53
    %v55 = vpop.xlane.xlu0 %54
    %v56 = vrcp.pop %v55
    %v57 = vmul.f32 %v48, %v56
    %58 = vst.msk [vmem:[%s3] sm:$0x3] %vm42, %v57
    %60 = vrot.lane.b32.xlu0 %v27, 120
    %v61 = vpop.permute.xlu0 %60
    %v63 = vadd.f32 %v41, %v61
    %v64 = vmul.f32 %v63, 0.5
    %v65 = vsel %vm28, %v64, -inf
    %66 = vmax.xlane.f32.xlu0 %v65
    %v67 = vpop.xlane.xlu0 %66
    %v68 = vsub.f32 %v64, %v67
    %v69 = vmul.f32 %v68, 1.442695
    %v70 = vpow.pop %v69
    %v71 = vsel %vm28, %v70, 0.0
    %72 = vadd.xlane.f32.xlu0 %v71
    %v73 = vpop.xlane.xlu0 %72
    %v74 = vrcp.pop %v73
    %v75 = vmul.f32 %v70, %v74
    %76 = vst.msk [vmem:[#allocation2] sm:$0x3] %vm28, %v75
    // Predicated region
    $region10: #{_tta_forward.3} parent=1 // pred_check
      _
    $region11: #{_tta_forward.3} parent=1 // pred_check_branch
      %78 = sbr.rel (0) target = $region13
    $region12: #{_tta_forward.3} parent=1 // pred_region
      %s80 = ssub.s32 32, 32
      %81 = vsyncadd [#allocation3], %s80
      %s83 = sshll.u32 [#allocation2], 4
      %s84 = int_to_ptr.vmem [resolvable:$true] %s83
      %86 = dma.vmem_to_hbm [thread:$0]  %s84, 32, %s2, [#allocation3]
    $region13: #{_tta_forward.3} parent=1 // pred_fallthru
      _
    // Predicated region
    $region14: #{_tta_forward.3} parent=1 // pred_check
      _
    $region15: #{_tta_forward.3} parent=1 // pred_check_branch
      %88 = sbr.rel (0) target = $region17
    $region16: #{_tta_forward.3} parent=1 // pred_region
      _
    $region17: #{_tta_forward.3} parent=1 // pred_fallthru
      _
    // Predicated region
    $region18: #{_tta_forward.3} parent=1 // pred_check
      _
    $region19: #{_tta_forward.3} parent=1 // pred_check_branch
      %90 = sbr.rel (0) target = $region21
    $region20: #{_tta_forward.3} parent=1 // pred_region
      %91 = dma.done [#allocation3], 32
    $region21: #{_tta_forward.3} parent=1 // pred_fallthru
      _
    // Predicated region
    $region22: #{_tta_forward.3} parent=1 // pred_check
      _
    $region23: #{_tta_forward.3} parent=1 // pred_check_branch
      %93 = sbr.rel (0) target = $region25
    $region24: #{_tta_forward.3} parent=1 // pred_region
      _
    $region25: #{_tta_forward.3} parent=1 // pred_fallthru
      _
    %94 = vsyncpa [#allocation3], 1

// kernel: _tta_forward.2
$region0: #{_tta_forward.2}
  #allocation0 [shape = 'u32[]', space=smem, size = 0x4, offset = 0x4, fixed_abs, tag = 'smem constant byte address 0x4 - core index']
  #allocation1 [shape = 'u32[144,128]{1,0:T(1,128)}', space=vmem, size = 0x12000, scoped, tag = 'internal scratch']
  %s0 = inlined_call_operand.vmem [shape: bf16[2,1024], index: 0, kind: input, shape index: {}]
  %s1 = inlined_call_operand.vmem [shape: bf16[1024,16], index: 1, kind: input, shape index: {}]
  %s2 = inlined_call_operand.vmem [shape: f32[2,2,16], index: 2, kind: output, shape index: {}]
  %s3 = sld [smem:[#allocation0]]
  $region45: #{_tta_forward.2} parent=0
    _
  %s5 = ssub.s32 1, %s3
  %s6 = scalar_select 0, %s5, %s3
  loop: start=0, step=1, limit=4
  $region2: #{_tta_forward.2} parent=0 // loop_pre_header
    _
  $region3: #{_tta_forward.2} parent=0 // loop_header
    %s8 = sphi 0, %s12
    %p9 = scmp.ge.s32.totalorder %s8, 4
    %s15 = sphi 0, %s27
    %s16 = sphi 0, %s23
    %s17 = sphi 0, %s15
    %s18 = sphi 0, %s16
    %s19 = sphi 0, %s17
    %s20 = sphi 0, %s18
    %s32 = sphi 0, %s34
    %s35 = sphi 0, %s32
    %s36 = sphi 0, %s35
    %s52 = sphi 0, %s36
    %s60 = sphi 0, %s62
    %s63 = sphi 0, %s60
    %s64 = sphi 0, %s63
    %s80 = sphi 0, %s64
    %s86 = sphi 0, %s88
    %s89 = sphi 0, %s86
    %s90 = sphi 0, %s89
    %s106 = sphi 0, %s90
  $region4: #{_tta_forward.2} parent=0 // loop_header_branch
    %11 = sbr.rel (%p9) target = $region8
  $region5: #{_tta_forward.2} parent=0 // loop_body
    %s13 = ssub.s32 %s8, 1
    %s14 = ssub.s32 %s8, 2
    %s21 = sadd.s32 1, %s16
    %p22 = scmp.ge.s32.totalorder %s21, 1
    %s23 = scalar_select %p22, 0, %s21
    %s24 = sadd.s32 1, %s15
    %s25 = scalar_select %p22, %s24, %s15
    %p26 = scmp.ge.s32.totalorder %s25, 2
    %s27 = scalar_select %p26, 0, %s25
    %s28 = sadd.s32 %s15, %s16
    %s29 = sadd.s32 %s27, %s23
    %s30 = ssub.s32 %s28, %s29
    %p31 = scmp.eq.s32.totalorder %s30, 0
    %s33 = sadd.s32 %s32, 1
    %s34 = scalar_select %p31, %s32, %s33
    %p37 = pneg %p31
    %p38 = scmp.eq.s32.totalorder %s8, 1
    %p39 = por %p37, %p38
    %p40 = scmp.ne.s32.totalorder %s32, %s35
    %p41 = scmp.eq.s32.totalorder %s8, 0
    %p42 = por %p40, %p41
    %p43 = scmp.ne.s32.totalorder %s32, %s35
    %p44 = scmp.eq.s32.totalorder %s13, 1
    %p45 = por %p43, %p44
    %p46 = scmp.ne.s32.totalorder %s35, %s36
    %p47 = scmp.eq.s32.totalorder %s13, 0
    %p48 = por %p46, %p47
    %p49 = scmp.ne.s32.totalorder %s35, %s36
    %p50 = scmp.eq.s32.totalorder %s14, 1
    %p51 = por %p49, %p50
    %p53 = scmp.ne.s32.totalorder %s36, %s52
    %p54 = scmp.eq.s32.totalorder %s14, 0
    %p55 = por %p53, %p54
    %s56 = sadd.s32 %s15, %s16
    %s57 = sadd.s32 %s27, %s23
    %s58 = ssub.s32 %s56, %s57
    %p59 = scmp.eq.s32.totalorder %s58, 0
    %s61 = sadd.s32 %s60, 1
    %s62 = scalar_select %p59, %s60, %s61
    %p65 = pneg %p59
    %p66 = scmp.eq.s32.totalorder %s8, 1
    %p67 = por %p65, %p66
    %p68 = scmp.ne.s32.totalorder %s60, %s63
    %p69 = scmp.eq.s32.totalorder %s8, 0
    %p70 = por %p68, %p69
    %p71 = scmp.ne.s32.totalorder %s60, %s63
    %p72 = scmp.eq.s32.totalorder %s13, 1
    %p73 = por %p71, %p72
    %p74 = scmp.ne.s32.totalorder %s63, %s64
    %p75 = scmp.eq.s32.totalorder %s13, 0
    %p76 = por %p74, %p75
    %p77 = scmp.ne.s32.totalorder %s63, %s64
    %p78 = scmp.eq.s32.totalorder %s14, 1
    %p79 = por %p77, %p78
    %p81 = scmp.ne.s32.totalorder %s64, %s80
    %p82 = scmp.eq.s32.totalorder %s14, 0
    %p83 = por %p81, %p82
    %s84 = ssub.s32 %s15, %s27
    %p85 = scmp.eq.s32.totalorder %s84, 0
    %s87 = sadd.s32 %s86, 1
    %s88 = scalar_select %p85, %s86, %s87
    %p91 = pneg %p85
    %p92 = scmp.eq.s32.totalorder %s8, 1
    %p93 = por %p91, %p92
    %p94 = scmp.ne.s32.totalorder %s86, %s89
    %p95 = scmp.eq.s32.totalorder %s8, 0
    %p96 = por %p94, %p95
    %p97 = scmp.ne.s32.totalorder %s86, %s89
    %p98 = scmp.eq.s32.totalorder %s13, 1
    %p99 = por %p97, %p98
    %p100 = scmp.ne.s32.totalorder %s89, %s90
    %p101 = scmp.eq.s32.totalorder %s13, 0
    %p102 = por %p100, %p101
    %p103 = scmp.ne.s32.totalorder %s89, %s90
    %p104 = scmp.eq.s32.totalorder %s14, 1
    %p105 = por %p103, %p104
    %p107 = scmp.ne.s32.totalorder %s90, %s106
    %p108 = scmp.eq.s32.totalorder %s14, 0
    %p109 = por %p107, %p108
    %p110 = scmp.le.s32.totalorder 1, %s8
    %p111 = scmp.lt.s32.totalorder %s8, 3
    %p112 = pnand %p110, %p111
    %p113 = pneg %p112
    // Predicated region
    $region9: #{_tta_forward.2} parent=5 // pred_check
      _
    $region10: #{_tta_forward.2} parent=5 // pred_check_branch
      %115 = sbr.rel (%p112) target = $region12
    $region11: #{_tta_forward.2} parent=5 // pred_region
      %s116 = ssub.s32 %s8, 1
    $region12: #{_tta_forward.2} parent=5 // pred_fallthru
      _
    %p117 = scmp.lt.s32.totalorder %s8, 2
    // Predicated region
    $region13: #{_tta_forward.2} parent=5 // pred_check
      %p118 = pneg %p117
    $region14: #{_tta_forward.2} parent=5 // pred_check_branch
      %120 = sbr.rel (%p118) target = $region16
    $region15: #{_tta_forward.2} parent=5 // pred_region
      // Predicated region
      $region17: #{_tta_forward.2} parent=15 // pred_check
        %p121 = pneg %p42
      $region18: #{_tta_forward.2} parent=15 // pred_check_branch
        %123 = sbr.rel (%p121) target = $region20
      $region19: #{_tta_forward.2} parent=15 // pred_region
        %s124 = sadd.s32 %s15, %s16
        %s125 = smul.u32 4, %s124
        %p126 = scmp.lt.s32.totalorder %s125, 7
        %s127 = scalar_select %p126, %s125, 7
        %s128 = scalar_lea.vmem %s0, %s127
        %s129 = sadd.s32 %s15, %s16
        %s130 = smul.u32 4, %s129
      $region20: #{_tta_forward.2} parent=15 // pred_fallthru
        _
      // Predicated region
      $region21: #{_tta_forward.2} parent=15 // pred_check
        %p131 = pneg %p70
      $region22: #{_tta_forward.2} parent=15 // pred_check_branch
        %133 = sbr.rel (%p131) target = $region24
      $region23: #{_tta_forward.2} parent=15 // pred_region
        %s134 = sadd.s32 %s15, %s16
        %s135 = smul.u32 64, %s134
        %p136 = scmp.lt.s32.totalorder %s135, 127
        %s137 = scalar_select %p136, %s135, 127
        %s138 = smul.addr %s137, 4
        %s139 = scalar_lea.vmem %s1, %s138
        %s140 = sadd.s32 %s15, %s16
        %s141 = smul.u32 64, %s140
      $region24: #{_tta_forward.2} parent=15 // pred_fallthru
        _
    $region16: #{_tta_forward.2} parent=5 // pred_fallthru
      _
    %p142 = scmp.le.s32.totalorder 1, %s8
    %p143 = scmp.lt.s32.totalorder %s8, 3
    %p144 = pnand %p142, %p143
    %p145 = pneg %p144
    // Predicated region
    $region25: #{_tta_forward.2} parent=5 // pred_check
      _
    $region26: #{_tta_forward.2} parent=5 // pred_check_branch
      %147 = sbr.rel (%p144) target = $region28
    $region27: #{_tta_forward.2} parent=5 // pred_region
      %s148 = ssub.s32 %s8, 1
      %s149 = sadd.s32 %s17, %s18
      %s150 = smul.u32 4, %s149
      %p151 = scmp.lt.s32.totalorder %s150, 7
      %s152 = scalar_select %p151, %s150, 7
      %s153 = scalar_lea.vmem %s0, %s152
      %p154 = pneg %p48
      %p155 = pneg %p45
      %s156 = sadd.s32 %s17, %s18
      %s157 = smul.u32 64, %s156
      %p158 = scmp.lt.s32.totalorder %s157, 127
      %s159 = scalar_select %p158, %s157, 127
      %s160 = smul.addr %s159, 4
      %s161 = scalar_lea.vmem %s1, %s160
      %p162 = pneg %p76
      %p163 = pneg %p73
      %p164 = pneg %p102
      %p165 = pneg %p99
      %p166 = scmp.lt.s32.totalorder %s17, 1
      %s167 = scalar_select %p166, %s17, 1
      %s168 = smul.addr %s167, 2
      %s169 = scalar_lea.vmem %s2, %s168
      %s170 = sadd.s32 %s17, %s18
      %s171 = smul.u32 4, %s170
      %p172 = scmp.lt.s32.totalorder %s171, 7
      %s173 = scalar_select %p172, %s171, 7
      %s174 = scalar_lea.vmem %s0, %s173
      %s175 = sadd.s32 %s17, %s18
      %s176 = smul.u32 4, %s175
      %s177 = sadd.s32 %s17, %s18
      %s178 = smul.u32 64, %s177
      %p179 = scmp.lt.s32.totalorder %s178, 127
      %s180 = scalar_select %p179, %s178, 127
      %s181 = smul.addr %s180, 4
      %s182 = scalar_lea.vmem %s1, %s181
      %s183 = sadd.s32 %s17, %s18
      %s184 = smul.u32 64, %s183
      %p185 = scmp.lt.s32.totalorder %s17, 1
      %s186 = scalar_select %p185, %s17, 1
      %s187 = smul.addr %s186, 2
      %s188 = scalar_lea.vmem %s2, %s187
      %p190 = scmp.eq.s32.totalorder %s18, 0
      // Predicated region
      $region29: #{_tta_forward.2} parent=27 // pred_check
        %p191 = pneg %p190
      $region30: #{_tta_forward.2} parent=27 // pred_check_branch
        %193 = sbr.rel (%p191) target = $region32
      $region31: #{_tta_forward.2} parent=27 // pred_region
        %vm194 = vcmask 123904
        %195 = vst.msk [vmem:[%s188] sm:$0x3] %vm194, 0.0
      $region32: #{_tta_forward.2} parent=27 // pred_fallthru
        _
      %v196 = vld [vmem:[%s188] sm:$0x3]
      %v197 = vld [vmem:[%s174] sm:$0xf]
      %v198 = vld [vmem:[%s182] sm:$0xf]
      %v199 = vld [vmem:[%s182 + $0x4] sm:$0xf]
      %v200 = vld [vmem:[%s182 + $0x8] sm:$0xf]
      %v201 = vld [vmem:[%s182 + $0xc] sm:$0xf]
      %v202 = vld [vmem:[%s182 + $0x10] sm:$0xf]
      %v203 = vld [vmem:[%s182 + $0x14] sm:$0xf]
      %v204 = vld [vmem:[%s182 + $0x18] sm:$0xf]
      %v205 = vld [vmem:[%s182 + $0x1c] sm:$0xf]
      %v206 = vld [vmem:[%s182 + $0x20] sm:$0xf]
      %v207 = vld [vmem:[%s182 + $0x24] sm:$0xf]
      %v208 = vld [vmem:[%s182 + $0x28] sm:$0xf]
      %v209 = vld [vmem:[%s182 + $0x2c] sm:$0xf]
      %v210 = vld [vmem:[%s182 + $0x30] sm:$0xf]
      %v211 = vld [vmem:[%s182 + $0x34] sm:$0xf]
      %v212 = vld [vmem:[%s182 + $0x38] sm:$0xf]
      %v213 = vld [vmem:[%s182 + $0x3c] sm:$0xf]
      %v214 = vld [vmem:[%s182 + $0x40] sm:$0xf]
      %v215 = vld [vmem:[%s182 + $0x44] sm:$0xf]
      %v216 = vld [vmem:[%s182 + $0x48] sm:$0xf]
      %v217 = vld [vmem:[%s182 + $0x4c] sm:$0xf]
      %v218 = vld [vmem:[%s182 + $0x50] sm:$0xf]
      %v219 = vld [vmem:[%s182 + $0x54] sm:$0xf]
      %v220 = vld [vmem:[%s182 + $0x58] sm:$0xf]
      %v221 = vld [vmem:[%s182 + $0x5c] sm:$0xf]
      %v222 = vld [vmem:[%s182 + $0x60] sm:$0xf]
      %v223 = vld [vmem:[%s182 + $0x64] sm:$0xf]
      %v224 = vld [vmem:[%s182 + $0x68] sm:$0xf]
      %v225 = vld [vmem:[%s182 + $0x6c] sm:$0xf]
      %v226 = vld [vmem:[%s182 + $0x70] sm:$0xf]
      %v227 = vld [vmem:[%s182 + $0x74] sm:$0xf]
      %v228 = vld [vmem:[%s182 + $0x78] sm:$0xf]
      %v229 = vld [vmem:[%s182 + $0x7c] sm:$0xf]
      %v230 = vld [vmem:[%s182 + $0x80] sm:$0xf]
      %v231 = vld [vmem:[%s182 + $0x84] sm:$0xf]
      %v232 = vld [vmem:[%s182 + $0x88] sm:$0xf]
      %v233 = vld [vmem:[%s182 + $0x8c] sm:$0xf]
      %v234 = vld [vmem:[%s182 + $0x90] sm:$0xf]
      %v235 = vld [vmem:[%s182 + $0x94] sm:$0xf]
      %v236 = vld [vmem:[%s182 + $0x98] sm:$0xf]
      %v237 = vld [vmem:[%s182 + $0x9c] sm:$0xf]
      %v238 = vld [vmem:[%s182 + $0xa0] sm:$0xf]
      %v239 = vld [vmem:[%s182 + $0xa4] sm:$0xf]
      %v240 = vld [vmem:[%s182 + $0xa8] sm:$0xf]
      %v241 = vld [vmem:[%s182 + $0xac] sm:$0xf]
      %v242 = vld [vmem:[%s182 + $0xb0] sm:$0xf]
      %v243 = vld [vmem:[%s182 + $0xb4] sm:$0xf]
      %v244 = vld [vmem:[%s182 + $0xb8] sm:$0xf]
      %v245 = vld [vmem:[%s182 + $0xbc] sm:$0xf]
      %v246 = vld [vmem:[%s182 + $0xc0] sm:$0xf]
      %v247 = vld [vmem:[%s182 + $0xc4] sm:$0xf]
      %v248 = vld [vmem:[%s182 + $0xc8] sm:$0xf]
      %v249 = vld [vmem:[%s182 + $0xcc] sm:$0xf]
      %v250 = vld [vmem:[%s182 + $0xd0] sm:$0xf]
      %v251 = vld [vmem:[%s182 + $0xd4] sm:$0xf]
      %v252 = vld [vmem:[%s182 + $0xd8] sm:$0xf]
      %v253 = vld [vmem:[%s182 + $0xdc] sm:$0xf]
      %v254 = vld [vmem:[%s182 + $0xe0] sm:$0xf]
      %v255 = vld [vmem:[%s182 + $0xe4] sm:$0xf]
      %v256 = vld [vmem:[%s182 + $0xe8] sm:$0xf]
      %v257 = vld [vmem:[%s182 + $0xec] sm:$0xf]
      %v258 = vld [vmem:[%s182 + $0xf0] sm:$0xf]
      %v259 = vld [vmem:[%s182 + $0xf4] sm:$0xf]
      %v260 = vld [vmem:[%s182 + $0xf8] sm:$0xf]
      %v261 = vld [vmem:[%s182 + $0xfc] sm:$0xf]
      %v264 = vunpack.c.l.s4 1966171168
      %v265 = vunpack.c.0.s8 %v264
      %v266 = vlaneseq
      %v267 = vshrl.u32 %v266, 7
      %v268 = vsub.s32 %v265, %v267
      %v269 = vrot.slane %v197, %v268
      %v270 = vcombine.high %v269, %v269
      %v272 = vunpack.c.l.s4 1966171168
      %v273 = vunpack.c.0.s8 %v272
      %v274 = vlaneseq
      %v275 = vshrl.u32 %v274, 7
      %v276 = vsub.s32 %v273, %v275
      %v277 = vrot.slane %v269, %v276
      %v279 = vunpack.c.l.s4 1966171168
      %v280 = vunpack.c.0.s8 %v279
      %v281 = vlaneseq
      %v282 = vshrl.u32 %v281, 7
      %v283 = vsub.s32 %v280, %v282
      %v284 = vrot.slane %v270, %v283
      %v285 = vcombine.high %v277, %v277
      %v286 = vcombine.high %v284, %v284
      %v355 = vunpack.c.l.b16 %v198
      %v356 = vunpack.c.l.b16 %v199
      %v357 = vunpack.c.l.b16 %v200
      %v358 = vunpack.c.l.b16 %v201
      %v359 = vunpack.c.l.b16 %v202
      %v360 = vunpack.c.l.b16 %v203
      %v361 = vunpack.c.l.b16 %v204
      %v362 = vunpack.c.l.b16 %v205
      %v363 = vunpack.c.l.b16 %v206
      %v364 = vunpack.c.l.b16 %v207
      %v365 = vunpack.c.l.b16 %v208
      %v366 = vunpack.c.l.b16 %v209
      %v367 = vunpack.c.l.b16 %v210
      %v368 = vunpack.c.l.b16 %v211
      %v369 = vunpack.c.l.b16 %v212
      %v370 = vunpack.c.l.b16 %v213
      %v371 = vunpack.c.l.b16 %v214
      %v372 = vunpack.c.l.b16 %v215
      %v373 = vunpack.c.l.b16 %v216
      %v374 = vunpack.c.l.b16 %v217
      %v375 = vunpack.c.l.b16 %v218
      %v376 = vunpack.c.l.b16 %v219
      %v377 = vunpack.c.l.b16 %v220
      %v378 = vunpack.c.l.b16 %v221
      %v379 = vunpack.c.l.b16 %v222
      %v380 = vunpack.c.l.b16 %v223
      %v381 = vunpack.c.l.b16 %v224
      %v382 = vunpack.c.l.b16 %v225
      %v383 = vunpack.c.l.b16 %v226
      %v384 = vunpack.c.l.b16 %v227
      %v385 = vunpack.c.l.b16 %v228
      %v386 = vunpack.c.l.b16 %v229
      %v387 = vunpack.c.l.b16 %v230
      %v388 = vunpack.c.l.b16 %v231
      %v389 = vunpack.c.l.b16 %v232
      %v390 = vunpack.c.l.b16 %v233
      %v391 = vunpack.c.l.b16 %v234
      %v392 = vunpack.c.l.b16 %v235
      %v393 = vunpack.c.l.b16 %v236
      %v394 = vunpack.c.l.b16 %v237
      %v395 = vunpack.c.l.b16 %v238
      %v396 = vunpack.c.l.b16 %v239
      %v397 = vunpack.c.l.b16 %v240
      %v398 = vunpack.c.l.b16 %v241
      %v399 = vunpack.c.l.b16 %v242
      %v400 = vunpack.c.l.b16 %v243
      %v401 = vunpack.c.l.b16 %v244
      %v402 = vunpack.c.l.b16 %v245
      %v403 = vunpack.c.l.b16 %v246
      %v404 = vunpack.c.l.b16 %v247
      %v405 = vunpack.c.l.b16 %v248
      %v406 = vunpack.c.l.b16 %v249
      %v407 = vunpack.c.l.b16 %v250
      %v408 = vunpack.c.l.b16 %v251
      %v409 = vunpack.c.l.b16 %v252
      %v410 = vunpack.c.l.b16 %v253
      %v411 = vunpack.c.l.b16 %v254
      %v412 = vunpack.c.l.b16 %v255
      %v413 = vunpack.c.l.b16 %v256
      %v414 = vunpack.c.l.b16 %v257
      %v415 = vunpack.c.l.b16 %v258
      %v416 = vunpack.c.l.b16 %v259
      %v417 = vunpack.c.l.b16 %v260
      %v418 = vunpack.c.l.b16 %v261
      %v419 = vpack.c.b16 %v356, %v355
      %v420 = vpack.c.b16 %v358, %v357
      %v421 = vpack.c.b16 %v360, %v359
      %v422 = vpack.c.b16 %v362, %v361
      %v423 = vpack.c.b16 %v364, %v363
      %v424 = vpack.c.b16 %v366, %v365
      %v425 = vpack.c.b16 %v368, %v367
      %v426 = vpack.c.b16 %v370, %v369
      %v427 = vpack.c.b16 %v372, %v371
      %v428 = vpack.c.b16 %v374, %v373
      %v429 = vpack.c.b16 %v376, %v375
      %v430 = vpack.c.b16 %v378, %v377
      %v431 = vpack.c.b16 %v380, %v379
      %v432 = vpack.c.b16 %v382, %v381
      %v433 = vpack.c.b16 %v384, %v383
      %v434 = vpack.c.b16 %v386, %v385
      %v435 = vpack.c.b16 %v388, %v387
      %v436 = vpack.c.b16 %v390, %v389
      %v437 = vpack.c.b16 %v392, %v391
      %v438 = vpack.c.b16 %v394, %v393
      %v439 = vpack.c.b16 %v396, %v395
      %v440 = vpack.c.b16 %v398, %v397
      %v441 = vpack.c.b16 %v400, %v399
      %v442 = vpack.c.b16 %v402, %v401
      %v443 = vpack.c.b16 %v404, %v403
      %v444 = vpack.c.b16 %v406, %v405
      %v445 = vpack.c.b16 %v408, %v407
      %v446 = vpack.c.b16 %v410, %v409
      %v447 = vpack.c.b16 %v412, %v411
      %v448 = vpack.c.b16 %v414, %v413
      %v449 = vpack.c.b16 %v416, %v415
      %v450 = vpack.c.b16 %v418, %v417
      %483 = vmatprep.subr.bf16.mxu0 0
      %484 = vmatpush1.bf16.msra.mxu0 %v426
      %485 = vmatprep.subr.bf16.mxu0 0
      %486 = vmatpush1.bf16.msra.mxu0 %v425
      %487 = vmatprep.subr.bf16.mxu0 0
      %488 = vmatpush1.bf16.msra.mxu0 %v424
      %489 = vmatprep.subr.bf16.mxu0 0
      %490 = vmatpush1.bf16.msra.mxu0 %v423
      %491 = vmatprep.subr.bf16.mxu0 0
      %492 = vmatpush1.bf16.msra.mxu0 %v422
      %493 = vmatprep.subr.bf16.mxu0 0
      %494 = vmatpush1.bf16.msra.mxu0 %v421
      %495 = vmatprep.subr.bf16.mxu0 0
      %496 = vmatpush1.bf16.msra.mxu0 %v420
      %497 = vmatprep.subr.bf16.mxu0 0
      %498 = vmatpush1.bf16.msra.mxu0 %v419
      %499 = vmatprep.subr.bf16.mxu0 0
      %500 = vmatpush2.bf16.msra.mxu0 %v434
      %501 = vmatprep.subr.bf16.mxu0 0
      %502 = vmatpush2.bf16.msra.mxu0 %v433
      %503 = vmatprep.subr.bf16.mxu0 0
      %504 = vmatpush2.bf16.msra.mxu0 %v432
      %505 = vmatprep.subr.bf16.mxu0 0
      %506 = vmatpush2.bf16.msra.mxu0 %v431
      %507 = vmatprep.subr.bf16.mxu0 0
      %508 = vmatpush2.bf16.msra.mxu0 %v430
      %509 = vmatprep.subr.bf16.mxu0 0
      %510 = vmatpush2.bf16.msra.mxu0 %v429
      %511 = vmatprep.subr.bf16.mxu0 0
      %512 = vmatpush2.bf16.msra.mxu0 %v428
      %513 = vmatprep.subr.bf16.mxu0 0
      %514 = vmatpush2.bf16.msra.mxu0 %v427
      %515 = vmatprep.mubr.bf16.mxu0 %v284
      %516 = vmatmul.mubr.bf16.gmra.mxu0 %v277
      %v517 = vpop.f32.mrf.mxu0
      %v518 = vadd.f32 0.0, %v517
      %v519 = vpop.f32.mrf.mxu0
      %v520 = vpop.f32.mrf.mxu0
      %v521 = vpop.f32.mrf.mxu0
      %522 = vdwg.mxu0
      %523 = vmatprep.subr.bf16.mxu0 0
      %524 = vmatpush1.bf16.msra.mxu0 %v442
      %525 = vmatprep.subr.bf16.mxu0 0
      %526 = vmatpush1.bf16.msra.mxu0 %v441
      %527 = vmatprep.subr.bf16.mxu0 0
      %528 = vmatpush1.bf16.msra.mxu0 %v440
      %529 = vmatprep.subr.bf16.mxu0 0
      %530 = vmatpush1.bf16.msra.mxu0 %v439
      %531 = vmatprep.subr.bf16.mxu0 0
      %532 = vmatpush1.bf16.msra.mxu0 %v438
      %533 = vmatprep.subr.bf16.mxu0 0
      %534 = vmatpush1.bf16.msra.mxu0 %v437
      %535 = vmatprep.subr.bf16.mxu0 0
      %536 = vmatpush1.bf16.msra.mxu0 %v436
      %537 = vmatprep.subr.bf16.mxu0 0
      %538 = vmatpush1.bf16.msra.mxu0 %v435
      %539 = vmatprep.subr.bf16.mxu0 0
      %540 = vmatpush2.bf16.msra.mxu0 %v450
      %541 = vmatprep.subr.bf16.mxu0 0
      %542 = vmatpush2.bf16.msra.mxu0 %v449
      %543 = vmatprep.subr.bf16.mxu0 0
      %544 = vmatpush2.bf16.msra.mxu0 %v448
      %545 = vmatprep.subr.bf16.mxu0 0
      %546 = vmatpush2.bf16.msra.mxu0 %v447
      %547 = vmatprep.subr.bf16.mxu0 0
      %548 = vmatpush2.bf16.msra.mxu0 %v446
      %549 = vmatprep.subr.bf16.mxu0 0
      %550 = vmatpush2.bf16.msra.mxu0 %v445
      %551 = vmatprep.subr.bf16.mxu0 0
      %552 = vmatpush2.bf16.msra.mxu0 %v444
      %553 = vmatprep.subr.bf16.mxu0 0
      %554 = vmatpush2.bf16.msra.mxu0 %v443
      %555 = vmatprep.mubr.bf16.mxu0 %v286
      %556 = vmatmul.mubr.bf16.gmra.mxu0 %v285
      %v557 = vpop.f32.mrf.mxu0
      %v558 = vadd.f32 %v518, %v557
      %v559 = vpop.f32.mrf.mxu0
      %v560 = vpop.f32.mrf.mxu0
      %v561 = vpop.f32.mrf.mxu0
      %562 = vdwg.mxu0
      %v563 = vadd.f32 %v196, %v558
      %vm564 = vcmask 123904
      %565 = vst.msk [vmem:[%s188] sm:$0x3] %vm564, %v563
      %p566 = scmp.lt.s32.totalorder %s17, 1
      %s567 = scalar_select %p566, %s17, 1
      %s568 = smul.addr %s567, 2
      %s569 = scalar_lea.vmem %s2, %s568
      // Predicated region
      $region33: #{_tta_forward.2} parent=27 // pred_check
        %p570 = pneg %p99
      $region34: #{_tta_forward.2} parent=27 // pred_check_branch
        %572 = sbr.rel (%p570) target = $region36
      $region35: #{_tta_forward.2} parent=27 // pred_region
        _
      $region36: #{_tta_forward.2} parent=27 // pred_fallthru
        _
    $region28: #{_tta_forward.2} parent=5 // pred_fallthru
      _
    %p573 = scmp.le.s32.totalorder 2, %s8
    // Predicated region
    $region37: #{_tta_forward.2} parent=5 // pred_check
      %p574 = pneg %p573
    $region38: #{_tta_forward.2} parent=5 // pred_check_branch
      %576 = sbr.rel (%p574) target = $region40
    $region39: #{_tta_forward.2} parent=5 // pred_region
      %s577 = ssub.s32 %s8, 2
      // Predicated region
      $region41: #{_tta_forward.2} parent=39 // pred_check
        %p578 = pneg %p105
      $region42: #{_tta_forward.2} parent=39 // pred_check_branch
        %580 = sbr.rel (%p578) target = $region44
      $region43: #{_tta_forward.2} parent=39 // pred_region
        %p581 = scmp.lt.s32.totalorder %s19, 1
        %s582 = scalar_select %p581, %s19, 1
        %s583 = smul.addr %s582, 2
        %s584 = scalar_lea.vmem %s2, %s583
      $region44: #{_tta_forward.2} parent=39 // pred_fallthru
        _
    $region40: #{_tta_forward.2} parent=5 // pred_fallthru
      _
  $region6: #{_tta_forward.2} parent=0 // loop_footer
    %s12 = sadd.s32 1, %s8
  $region7: #{_tta_forward.2} parent=0 // loop_footer_branch
    %7 = sbr.rel target = $region3
  $region8: #{_tta_forward.2} parent=0 // loop_exit
    _

</llo_original>
